<compile_context>
chip_gen: v7x
topology: tpu7x:2x2x1
jax: 0.10.0
libtpu: 0.0.40
codegen_flags: <defaults>
</compile_context>

<pallas_src>
import functools

import jax
import jax.numpy as jnp
from jax.experimental import pallas as pl
from jax.experimental.pallas import tpu as pltpu


def _round_up(x, m):
    return ((x + m - 1) // m) * m


def _choose_tiles(M, D, N):
    # Sized so that (x + W^T + bias + out) double-buffered + acc stays well under the
    # 32 MiB default-scoped VMEM on v7x (64 MiB physical); v5e/v6e have more headroom.
    tm = min(256, _round_up(M, 8))
    tk = min(512, _round_up(D, 128))
    tn = min(512, _round_up(N, 128))
    return tm, tk, tn


def _spectral_linear_kernel(scale_ref, x_ref, wt_ref, b_ref, o_ref, acc_ref):
    """One (tm, tn) output tile, accumulated over the K grid axis.

    scale_ref: SMEM f32[2] = [k_lipschitz, 1/sigma]
    x_ref:     VMEM (tm, tk)   activations
    wt_ref:    VMEM (tk, tn)   pre-transposed weight W^T  (no in-kernel transpose)
    b_ref:     VMEM (1,  tn)   bias
    o_ref:     VMEM (tm, tn)   output tile
    acc_ref:   VMEM (tm, tn)   f32 scratch accumulator
    """
    k_step = pl.program_id(2)

    @pl.when(k_step == 0)
    def _():
        acc_ref[...] = jnp.zeros_like(acc_ref)

    acc_ref[...] += jnp.dot(x_ref[...], wt_ref[...],
                            preferred_element_type=jnp.float32)

    # Epilogue only on the final K step: y = (k/sigma) * (x@W^T) + k*b
    @pl.when(k_step == pl.num_programs(2) - 1)
    def _():
        k = scale_ref[0]
        inv_sigma = scale_ref[1]
        o_ref[...] = ((k * inv_sigma) * acc_ref[...]
                      + k * b_ref[...]).astype(o_ref.dtype)


@functools.partial(
    jax.jit,
    static_argnames=("k_lipschitz", "n_power_iterations", "use_bf16"),
)
def spectral_linear(x, w, b, u0=None, *, k_lipschitz=1.0, n_power_iterations=1,
                    eps=1e-12, use_bf16=False):
    """Forward pass of SpectralLinear.

    x:  (M, D) float32
    w:  (N, D) float32  raw (un-normalized) weight, torch nn.Linear layout
    b:  (N,)   float32
    u0: (N,)   float32  power-iteration left-singular-vector estimate
    """
    M, D = x.shape
    N = w.shape[0]

    # --- glue: spectral norm estimate (matches torch spectral_norm forward) ---
    if k_lipschitz is None:
        scale = jnp.array([1.0, 1.0], dtype=jnp.float32)
    else:
        def _normalize(v):
            return v / jnp.maximum(jnp.linalg.norm(v), eps)

        u = _normalize(u0)
        wv = None
        for _ in range(n_power_iterations):
            v = _normalize(w.T @ u)   # (D,)
            wv = w @ v                # (N,)  computed once, reused below
            u = _normalize(wv)
        sigma = u @ wv                # == u^T W v  (== ||W v|| up to eps clamp)
        scale = jnp.stack([jnp.asarray(k_lipschitz, jnp.float32),
                           (1.0 / sigma).astype(jnp.float32)])
    # TODO(synk): torch's spectral_norm persists the updated u buffer across calls;
    # here u is recomputed from u0 each call and not written back.

    # --- layout plumbing: pre-transpose W and pad to lane/sublane-friendly shapes ---
    tm, tk, tn = _choose_tiles(M, D, N)
    Mp, Dp, Np = _round_up(M, tm), _round_up(D, tk), _round_up(N, tn)

    dot_dtype = jnp.bfloat16 if use_bf16 else jnp.float32
    wt = w.T.astype(dot_dtype)                                   # (D, N)
    x_p = jnp.zeros((Mp, Dp), dot_dtype).at[:M, :D].set(x.astype(dot_dtype))
    wt_p = jnp.zeros((Dp, Np), dot_dtype).at[:D, :N].set(wt)
    b_p = jnp.zeros((1, Np), jnp.float32).at[0, :N].set(b.astype(jnp.float32))

    grid = (Mp // tm, Np // tn, Dp // tk)
    itemsize = jnp.dtype(dot_dtype).itemsize
    cost = pl.CostEstimate(
        flops=2 * Mp * Np * Dp,
        transcendentals=0,
        bytes_accessed=(Mp * Dp * itemsize + Dp * Np * itemsize
                        + Np * 4 + Mp * Np * 4 + 2 * 4),
    )

    out = pl.pallas_call(
        _spectral_linear_kernel,
        out_shape=jax.ShapeDtypeStruct((Mp, Np), jnp.float32),
        grid=grid,
        in_specs=[
            pl.BlockSpec(memory_space=pltpu.MemorySpace.SMEM),    # [k, 1/sigma]
            pl.BlockSpec((tm, tk), lambda i, j, kk: (i, kk)),     # x tile
            pl.BlockSpec((tk, tn), lambda i, j, kk: (kk, j)),     # W^T tile
            pl.BlockSpec((1, tn), lambda i, j, kk: (0, j)),       # bias tile
        ],
        out_specs=pl.BlockSpec((tm, tn), lambda i, j, kk: (i, j)),
        scratch_shapes=[pltpu.VMEM((tm, tn), jnp.float32)],
        compiler_params=pltpu.CompilerParams(
            dimension_semantics=("parallel", "parallel", "arbitrary")),
        cost_estimate=cost,
    )(scale, x_p, wt_p, b_p)

    return out[:M, :N]


if __name__ == "__main__":
    key = jax.random.PRNGKey(0)
    k_x, k_w, k_b, k_u = jax.random.split(key, 4)

    batch = 8
    input_dim = 32
    output_dim = 64
    k_lipschitz = 1.0

    # Deterministic "parameters" (shapes match nn.Linear(input_dim, output_dim)).
    x = jax.random.normal(k_x, (batch, input_dim), dtype=jnp.float32)
    w = jax.random.normal(k_w, (output_dim, input_dim), dtype=jnp.float32) * 0.1
    b = jax.random.normal(k_b, (output_dim,), dtype=jnp.float32) * 0.1
    u0 = jax.random.normal(k_u, (output_dim,), dtype=jnp.float32)

    y = spectral_linear(x, w, b, u0, k_lipschitz=k_lipschitz)
    y = jax.block_until_ready(y)

    # Pure-JAX reference of the same semantics (spectral-norm path).
    def _norm(v):
        return v / jnp.maximum(jnp.linalg.norm(v), 1e-12)

    u = _norm(u0)
    v = _norm(w.T @ u)
    wv = w @ v
    u = _norm(wv)
    sigma = u @ wv
    y_ref = k_lipschitz * (x @ (w / sigma).T + b)

    assert y.shape == (batch, output_dim)
    assert jnp.allclose(y, y_ref, atol=1e-4, rtol=1e-4)

    # Plain-linear path (k_lipschitz=None in the torch module).
    y_plain = spectral_linear(x, w, b, None, k_lipschitz=None)
    y_plain = jax.block_until_ready(y_plain)
    assert jnp.allclose(y_plain, x @ w.T + b, atol=1e-4, rtol=1e-4)

    print("KERNEL_OK")
</pallas_src>

<mosaic_0001>
module attributes {stable_mosaic.version = 11 : i64} {
  func.func @_spectral_linear_kernel(%arg0: i32, %arg1: i32, %arg2: i32, %arg3: memref<2xf32, #tpu.memory_space<smem>>, %arg4: memref<8x128xf32, #tpu.memory_space<vmem>>, %arg5: memref<128x128xf32, #tpu.memory_space<vmem>>, %arg6: memref<1x128xf32, #tpu.memory_space<vmem>>, %arg7: memref<8x128xf32, #tpu.memory_space<vmem>>, %arg8: memref<8x128xf32, #tpu.memory_space<vmem>>) attributes {dimension_semantics = [#tpu.dimension_semantics<parallel>, #tpu.dimension_semantics<parallel>, #tpu.dimension_semantics<arbitrary>], iteration_bounds = array<i64: 1, 1, 1>, scalar_prefetch = 0 : i64, scratch_operands = 1 : i64, tpu.core_type = #tpu.core_type<tc>, window_params = [{transform_indices = @transform_0, window_bounds = array<i64: 2>}, {transform_indices = @transform_1, window_bounds = array<i64: 8, 128>}, {transform_indices = @transform_2, window_bounds = array<i64: 128, 128>}, {transform_indices = @transform_3, window_bounds = array<i64: 1, 128>}, {transform_indices = @transform_4, window_bounds = array<i64: 8, 128>}]} {
    %c0_i32 = arith.constant 0 : i32
    %0 = arith.cmpi eq, %arg2, %c0_i32 : i32
    %1 = arith.extui %0 : i1 to i32
    %c0_i32_0 = arith.constant 0 : i32
    %2 = arith.cmpi ne, %1, %c0_i32_0 : i32
    scf.if %2 {
      %cst_10 = arith.constant 0.000000e+00 : f32
      %12 = vector.broadcast %cst_10 : f32 to vector<8x128xf32>
      %c0_11 = arith.constant 0 : index
      %c0_12 = arith.constant 0 : index
      %13 = vector.load %arg8[%c0_11, %c0_12] : memref<8x128xf32, #tpu.memory_space<vmem>>, vector<8x128xf32>
      tpu.vector_store %arg8[%c0_11, %c0_12], %12 {strides = array<i32>} : memref<8x128xf32, #tpu.memory_space<vmem>>, vector<8x128xf32>,
    } else {
    }
    %c0 = arith.constant 0 : index
    %c0_1 = arith.constant 0 : index
    %3 = vector.load %arg8[%c0, %c0_1] : memref<8x128xf32, #tpu.memory_space<vmem>>, vector<8x128xf32>
    %c0_2 = arith.constant 0 : index
    %c0_3 = arith.constant 0 : index
    %4 = vector.load %arg4[%c0_2, %c0_3] : memref<8x128xf32, #tpu.memory_space<vmem>>, vector<8x128xf32>
    %c0_4 = arith.constant 0 : index
    %c0_5 = arith.constant 0 : index
    %5 = vector.load %arg5[%c0_4, %c0_5] : memref<128x128xf32, #tpu.memory_space<vmem>>, vector<128x128xf32>
    %cst = arith.constant dense<0.000000e+00> : vector<8x128xf32>
    %6 = tpu.matmul %4, %5, %cst {dimension_numbers = #tpu.dot_dimension_numbers<[1], [0], [0], [1], [0, 0, 1, 1], [], []>} : vector<8x128xf32>, vector<128x128xf32>, vector<8x128xf32> -> vector<8x128xf32>
    %7 = arith.addf %3, %6 : vector<8x128xf32>
    %c0_6 = arith.constant 0 : index
    %c0_7 = arith.constant 0 : index
    %8 = vector.load %arg8[%c0_6, %c0_7] : memref<8x128xf32, #tpu.memory_space<vmem>>, vector<8x128xf32>
    tpu.vector_store %arg8[%c0_6, %c0_7], %7 {strides = array<i32>} : memref<8x128xf32, #tpu.memory_space<vmem>>, vector<8x128xf32>,
    %c0_i32_8 = arith.constant 0 : i32
    %9 = arith.cmpi eq, %arg2, %c0_i32_8 : i32
    %10 = arith.extui %9 : i1 to i32
    %c0_i32_9 = arith.constant 0 : i32
    %11 = arith.cmpi ne, %10, %c0_i32_9 : i32
    scf.if %11 {
      %c0_10 = arith.constant 0 : index
      %12 = memref.load %arg3[%c0_10] : memref<2xf32, #tpu.memory_space<smem>>
      %c1 = arith.constant 1 : index
      %13 = memref.load %arg3[%c1] : memref<2xf32, #tpu.memory_space<smem>>
      %14 = arith.mulf %12, %13 : f32
      %c0_11 = arith.constant 0 : index
      %c0_12 = arith.constant 0 : index
      %15 = vector.load %arg8[%c0_11, %c0_12] : memref<8x128xf32, #tpu.memory_space<vmem>>, vector<8x128xf32>
      %16 = vector.broadcast %14 : f32 to vector<8x128xf32>
      %17 = arith.mulf %16, %15 : vector<8x128xf32>
      %c0_13 = arith.constant 0 : index
      %c0_14 = arith.constant 0 : index
      %18 = vector.load %arg6[%c0_13, %c0_14] : memref<1x128xf32, #tpu.memory_space<vmem>>, vector<1x128xf32>
      %19 = vector.broadcast %12 : f32 to vector<1x128xf32>
      %20 = arith.mulf %19, %18 : vector<1x128xf32>
      %21 = vector.broadcast %20 : vector<1x128xf32> to vector<8x128xf32>
      %22 = arith.addf %17, %21 : vector<8x128xf32>
      %c0_15 = arith.constant 0 : index
      %c0_16 = arith.constant 0 : index
      %23 = vector.load %arg7[%c0_15, %c0_16] : memref<8x128xf32, #tpu.memory_space<vmem>>, vector<8x128xf32>
      tpu.vector_store %arg7[%c0_15, %c0_16], %22 {strides = array<i32>} : memref<8x128xf32, #tpu.memory_space<vmem>>, vector<8x128xf32>,
    } else {
    }
    return
  }
  func.func @transform_0(%arg0: i32, %arg1: i32, %arg2: i32) -> i32 {
    %c0_i32 = arith.constant 0 : i32
    %c0_i32_0 = arith.constant 0 : i32
    return %c0_i32 : i32
  }
  func.func @transform_1(%arg0: i32, %arg1: i32, %arg2: i32) -> (i32, i32) {
    %c0_i32 = arith.constant 0 : i32
    return %arg0, %arg2 : i32, i32
  }
  func.func @transform_2(%arg0: i32, %arg1: i32, %arg2: i32) -> (i32, i32) {
    %c0_i32 = arith.constant 0 : i32
    return %arg2, %arg1 : i32, i32
  }
  func.func @transform_3(%arg0: i32, %arg1: i32, %arg2: i32) -> (i32, i32) {
    %c0_i32 = arith.constant 0 : i32
    %c0_i32_0 = arith.constant 0 : i32
    return %c0_i32, %arg1 : i32, i32
  }
  func.func @transform_4(%arg0: i32, %arg1: i32, %arg2: i32) -> (i32, i32) {
    %c0_i32 = arith.constant 0 : i32
    return %arg0, %arg1 : i32, i32
  }
}

</mosaic_0001>

<llo_original>
// kernel: spectral_linear.1
$region0: #{spectral_linear.1}
  #allocation0 [shape = 'u32[]', space=smem, size = 0x4, offset = 0x4, fixed_abs, tag = 'smem constant byte address 0x4 - core index']
  #allocation1 [shape = 'u32[144,128]{1,0:T(1,128)}', space=vmem, size = 0x12000, scoped, tag = 'internal scratch']
  #allocation2 [shape = 'f32[8,128]{1,0:T(8,128)}', space=vmem, size = 0x1000, scoped, tag = 'scratch operand']
  %s0 = inlined_call_operand.vmem [shape: f32[2], index: 0, kind: input, shape index: {}]
  %s1 = inlined_call_operand.vmem [shape: f32[8,128], index: 1, kind: input, shape index: {}]
  %s2 = inlined_call_operand.vmem [shape: f32[128,128], index: 2, kind: input, shape index: {}]
  %s3 = inlined_call_operand.vmem [shape: f32[1,128], index: 3, kind: input, shape index: {}]
  %s4 = inlined_call_operand.hbm [shape: f32[8,128], index: 4, kind: output, shape index: {}]
  %s5 = sld [smem:[#allocation0]]
  $region38: #{spectral_linear.1} parent=0
    _
  %s7 = ssub.s32 1, %s5
  %s8 = scalar_select 0, %s7, %s5
  $region1: #{spectral_linear.1} parent=0
    #allocation3 [shape = 'u8[512]{0}', space=smem, size = 0x200, scoped, tag = 'input window, operand 0, single buffered']
    #allocation4 [shape = 's32[1]{0}', space=sflag, size = 0x4, scoped, tag = 'scoped memory for spectral_linear.1']
    #allocation5 [shape = 's32[1]{0}', space=sflag, size = 0x4, scoped, tag = 'scoped memory for spectral_linear.1']
    #allocation6 [shape = 'u8[4096]{0}', space=vmem, size = 0x1000, scoped, tag = 'output window, operand 0, single buffered']
    %9 = vsyncpa [#allocation5], 0
    %10 = vsyncpa [#allocation4], 0
    // Predicated region
    $region2: #{spectral_linear.1} parent=1 // pred_check
      _
    $region3: #{spectral_linear.1} parent=1 // pred_check_branch
      %12 = sbr.rel (0) target = $region5
    $region4: #{spectral_linear.1} parent=1 // pred_region
      %s14 = ssub.s32 16, 16
      %15 = vsyncadd [#allocation5], %s14
      %s17 = sshll.u32 %s0, 4
      %s18 = int_to_ptr.vmem [resolvable:$true] %s17
      %20 = dma.vmem_to_smem %s18, 16, [#allocation3], [#allocation5]
    $region5: #{spectral_linear.1} parent=1 // pred_fallthru
      _
    // Predicated region
    $region6: #{spectral_linear.1} parent=1 // pred_check
      _
    $region7: #{spectral_linear.1} parent=1 // pred_check_branch
      %22 = sbr.rel (0) target = $region9
    $region8: #{spectral_linear.1} parent=1 // pred_region
      _
    $region9: #{spectral_linear.1} parent=1 // pred_fallthru
      _
    // Predicated region
    $region10: #{spectral_linear.1} parent=1 // pred_check
      _
    $region11: #{spectral_linear.1} parent=1 // pred_check_branch
      %24 = sbr.rel (0) target = $region13
    $region12: #{spectral_linear.1} parent=1 // pred_region
      _
    $region13: #{spectral_linear.1} parent=1 // pred_fallthru
      _
    // Predicated region
    $region14: #{spectral_linear.1} parent=1 // pred_check
      _
    $region15: #{spectral_linear.1} parent=1 // pred_check_branch
      %26 = sbr.rel (0) target = $region17
    $region16: #{spectral_linear.1} parent=1 // pred_region
      _
    $region17: #{spectral_linear.1} parent=1 // pred_fallthru
      _
    // Predicated region
    $region18: #{spectral_linear.1} parent=1 // pred_check
      _
    $region19: #{spectral_linear.1} parent=1 // pred_check_branch
      %28 = sbr.rel (0) target = $region21
    $region20: #{spectral_linear.1} parent=1 // pred_region
      %29 = dma.done [#allocation5], 16
    $region21: #{spectral_linear.1} parent=1 // pred_fallthru
      _
    %30 = sfence
    %p31 = scmp.eq.s32.totalorder 0, 0
    // Predicated region
    $region22: #{spectral_linear.1} parent=1 // pred_check
      %p32 = pneg %p31
    $region23: #{spectral_linear.1} parent=1 // pred_check_branch
      %34 = sbr.rel (%p32) target = $region25
    $region24: #{spectral_linear.1} parent=1 // pred_region
      %35 = vst [vmem:[#allocation2] sm:$0xff] 0.0
    $region25: #{spectral_linear.1} parent=1 // pred_fallthru
      _
    %v36 = vld [vmem:[#allocation2] sm:$0xff]
    %v37 = vld [vmem:[%s1] sm:$0xff]
    %v38 = vld [vmem:[%s2] sm:$0xff]
    %v39 = vld [vmem:[%s2 + $0x8] sm:$0xff]
    %v40 = vld [vmem:[%s2 + $0x10] sm:$0xff]
    %v41 = vld [vmem:[%s2 + $0x18] sm:$0xff]
    %v42 = vld [vmem:[%s2 + $0x20] sm:$0xff]
    %v43 = vld [vmem:[%s2 + $0x28] sm:$0xff]
    %v44 = vld [vmem:[%s2 + $0x30] sm:$0xff]
    %v45 = vld [vmem:[%s2 + $0x38] sm:$0xff]
    %v46 = vld [vmem:[%s2 + $0x40] sm:$0xff]
    %v47 = vld [vmem:[%s2 + $0x48] sm:$0xff]
    %v48 = vld [vmem:[%s2 + $0x50] sm:$0xff]
    %v49 = vld [vmem:[%s2 + $0x58] sm:$0xff]
    %v50 = vld [vmem:[%s2 + $0x60] sm:$0xff]
    %v51 = vld [vmem:[%s2 + $0x68] sm:$0xff]
    %v52 = vld [vmem:[%s2 + $0x70] sm:$0xff]
    %v53 = vld [vmem:[%s2 + $0x78] sm:$0xff]
    %54 = vmatprep.subr.mxu0 0.0
    %55 = vmatpush1.msra.mxu0 %v38
    %56 = vmatprep.subr.mxu0 0.0
    %57 = vmatpush1.msra.mxu0 %v39
    %58 = vmatprep.subr.mxu0 0.0
    %59 = vmatpush1.msra.mxu0 %v40
    %60 = vmatprep.subr.mxu0 0.0
    %61 = vmatpush1.msra.mxu0 %v41
    %62 = vmatprep.subr.mxu0 0.0
    %63 = vmatpush1.msra.mxu0 %v42
    %64 = vmatprep.subr.mxu0 0.0
    %65 = vmatpush1.msra.mxu0 %v43
    %66 = vmatprep.subr.mxu0 0.0
    %67 = vmatpush1.msra.mxu0 %v44
    %68 = vmatprep.subr.mxu0 0.0
    %69 = vmatpush1.msra.mxu0 %v45
    %70 = vmatprep.subr.mxu0 0.0
    %71 = vmatpush1.msra.mxu0 %v46
    %72 = vmatprep.subr.mxu0 0.0
    %73 = vmatpush1.msra.mxu0 %v47
    %74 = vmatprep.subr.mxu0 0.0
    %75 = vmatpush1.msra.mxu0 %v48
    %76 = vmatprep.subr.mxu0 0.0
    %77 = vmatpush1.msra.mxu0 %v49
    %78 = vmatprep.subr.mxu0 0.0
    %79 = vmatpush1.msra.mxu0 %v50
    %80 = vmatprep.subr.mxu0 0.0
    %81 = vmatpush1.msra.mxu0 %v51
    %82 = vmatprep.subr.mxu0 0.0
    %83 = vmatpush1.msra.mxu0 %v52
    %84 = vmatprep.subr.mxu0 0.0
    %85 = vmatpush1.msra.mxu0 %v53
    %86 = vmatprep.subr.mxu0 0.0
    %87 = vmatpush1.msra.mxu0 0.0
    %88 = vmatprep.subr.mxu0 0.0
    %89 = vmatpush1.msra.mxu0 0.0
    %90 = vmatprep.subr.mxu0 0.0
    %91 = vmatpush1.msra.mxu0 0.0
    %92 = vmatprep.subr.mxu0 0.0
    %93 = vmatpush1.msra.mxu0 0.0
    %94 = vmatprep.subr.mxu0 0.0
    %95 = vmatpush1.msra.mxu0 0.0
    %96 = vmatprep.subr.mxu0 0.0
    %97 = vmatpush1.msra.mxu0 0.0
    %98 = vmatprep.subr.mxu0 0.0
    %99 = vmatpush1.msra.mxu0 0.0
    %100 = vmatprep.subr.mxu0 0.0
    %101 = vmatpush1.msra.mxu0 0.0
    %102 = vmatprep.subr.mxu0 0.0
    %103 = vmatpush1.msra.mxu0 0.0
    %104 = vmatprep.subr.mxu0 0.0
    %105 = vmatpush1.msra.mxu0 0.0
    %106 = vmatprep.subr.mxu0 0.0
    %107 = vmatpush1.msra.mxu0 0.0
    %108 = vmatprep.subr.mxu0 0.0
    %109 = vmatpush1.msra.mxu0 0.0
    %110 = vmatprep.subr.mxu0 0.0
    %111 = vmatpush1.msra.mxu0 0.0
    %112 = vmatprep.subr.mxu0 0.0
    %113 = vmatpush1.msra.mxu0 0.0
    %114 = vmatprep.subr.mxu0 0.0
    %115 = vmatpush1.msra.mxu0 0.0
    %116 = vmatprep.subr.mxu0 0.0
    %117 = vmatpush1.msra.mxu0 0.0
    %118 = vmatprep.mubr.f32.mxu0 0.0
    %119 = vmatmul.mubr.f32.gmra.mrb[0].mxu0 %v37
    %v120 = vpop.f32.mrb[0].mxu0
    %v121 = vadd.f32 0.0, %v120
    %v122 = vpop.f32.mrb[0].mxu0
    %123 = vdwg.mxu0
    %v124 = vadd.f32 %v36, %v121
    %125 = vst [vmem:[#allocation2] sm:$0xff] %v124
    // Predicated region
    $region26: #{spectral_linear.1} parent=1 // pred_check
      %p126 = pneg %p31
    $region27: #{spectral_linear.1} parent=1 // pred_check_branch
      %128 = sbr.rel (%p126) target = $region29
    $region28: #{spectral_linear.1} parent=1 // pred_region
      %s129 = sld [smem:[#allocation3]]
      %s130 = sld [smem:[#allocation3 + $0x1]]
      %s131 = smul.f32 %s129, %s130
      %v132 = vld [vmem:[#allocation2] sm:$0xff]
      %v133 = vstv %s131
      %v134 = vmul.f32 %v133, %v132
      %v135 = vld [vmem:[%s3] sm:$0x1]
      %v136 = vstv %s129
      %v137 = vmul.f32 %v136, %v135
      %v139 = vlaneseq
      %v140 = vshrl.u32 %v139, 7
      %v141 = vsub.s32 0, %v140
      %v142 = vrot.slane %v137, %v141
      %v144 = vadd.f32 %v134, %v142
      %145 = vst [vmem:[#allocation6] sm:$0xff] %v144
    $region29: #{spectral_linear.1} parent=1 // pred_fallthru
      _
    // Predicated region
    $region30: #{spectral_linear.1} parent=1 // pred_check
      _
    $region31: #{spectral_linear.1} parent=1 // pred_check_branch
      %147 = sbr.rel (0) target = $region33
    $region32: #{spectral_linear.1} parent=1 // pred_region
      %s149 = ssub.s32 128, 128
      %150 = vsyncadd [#allocation4], %s149
      %s152 = sshll.u32 [#allocation6], 4
      %s153 = int_to_ptr.vmem [resolvable:$true] %s152
      %155 = dma.vmem_to_hbm [thread:$0]  %s153, 128, %s4, [#allocation4]
    $region33: #{spectral_linear.1} parent=1 // pred_fallthru
      _
    // Predicated region
    $region34: #{spectral_linear.1} parent=1 // pred_check
      _
    $region35: #{spectral_linear.1} parent=1 // pred_check_branch
      %157 = sbr.rel (0) target = $region37
    $region36: #{spectral_linear.1} parent=1 // pred_region
      %158 = dma.done [#allocation4], 128
    $region37: #{spectral_linear.1} parent=1 // pred_fallthru
      _
    %159 = vsyncpa [#allocation4], 1
    %160 = vsyncpa [#allocation5], 1

</llo_original>
